<compile_context>
chip_gen: v7x
topology: tpu7x:2x2x1
jax: 0.10.0
libtpu: 0.0.40
codegen_flags: <defaults>
</compile_context>

<pallas_src>
import math
import functools

import jax
import jax.numpy as jnp
from jax.experimental import pallas as pl
from jax.experimental.pallas import tpu as pltpu


def _encoder_kernel(x_ref,
                    wqkv_ref, bqkv_ref,
                    w1_ref, b1_ref, w2_ref, b2_ref,
                    o_ref, *, batch, seq, hidden_dim):
    D = hidden_dim
    x = x_ref[...]                                      # (B*S, D) fp32

    # ---- SelfAttention ----
    # Fused QKV projection: one lane-dense (B*S, D) x (D, 3D) MXU matmul.
    qkv = jnp.dot(x, wqkv_ref[...],
                  preferred_element_type=jnp.float32) + bqkv_ref[...]
    q = qkv[:, 0 * D:1 * D].reshape(batch, seq, D)
    k = qkv[:, 1 * D:2 * D].reshape(batch, seq, D)
    v = qkv[:, 2 * D:3 * D].reshape(batch, seq, D)

    # scores = Q K^T / sqrt(D): contract the last axis of both operands
    # directly on the MXU (no explicit transpose of K).
    scores = jax.lax.dot_general(
        q, k,
        dimension_numbers=(((2,), (2,)), ((0,), (0,))),
        preferred_element_type=jnp.float32) * (1.0 / math.sqrt(D))

    # Numerically stable softmax; normalization deferred until after the
    # PV matmul and performed with an EUP reciprocal + multiply.
    m = jnp.max(scores, axis=-1, keepdims=True)
    e = jnp.exp(scores - m)                             # (B, S, S) unnormalized
    denom = jnp.sum(e, axis=-1, keepdims=True)          # (B, S, 1)
    pv = jax.lax.dot_general(
        e, v,
        dimension_numbers=(((2,), (1,)), ((0,), (0,))),
        preferred_element_type=jnp.float32)             # (B, S, D)
    attended = pv * pl.reciprocal(denom, approx=True)

    h = x + attended.reshape(batch * seq, D)            # attention residual

    # ---- FeedForward ----
    f1 = jnp.dot(h, w1_ref[...],
                 preferred_element_type=jnp.float32) + b1_ref[...]
    f1 = jnp.maximum(f1, 0.0)                           # relu
    f2 = jnp.dot(f1, w2_ref[...],
                 preferred_element_type=jnp.float32) + b2_ref[...]
    o_ref[...] = (f2 + f2).astype(o_ref.dtype)          # module does x = x + x


def prepare_params(params):
    """One-time weight prep (hoisted out of the forward path).

    PyTorch nn.Linear is y = x @ W.T + b with W (out, in); pre-transpose to
    (in, out) and fuse q|k|v into a single (D, 3D) projection.
    """
    f32 = lambda a: jnp.asarray(a, jnp.float32)
    wqkv = jnp.concatenate(
        [f32(params["wq"]).T, f32(params["wk"]).T, f32(params["wv"]).T], axis=1)
    bqkv = jnp.concatenate(
        [f32(params["bq"]), f32(params["bk"]), f32(params["bv"])]).reshape(1, -1)
    return {
        "wqkv": wqkv,                                   # (D, 3D)
        "bqkv": bqkv,                                   # (1, 3D)
        "w1t": f32(params["w1"]).T,                     # (D, D)
        "b1": f32(params["b1"]).reshape(1, -1),         # (1, D)
        "w2t": f32(params["w2"]).T,                     # (D, D)
        "b2": f32(params["b2"]).reshape(1, -1),         # (1, D)
    }


def transformer_encoder(x, prepped):
    """x: (B, S, D) float32.  prepped: output of prepare_params()."""
    B, S, D = x.shape
    x2d = x.reshape(B * S, D)                           # fold batch into rows

    kernel = functools.partial(_encoder_kernel, batch=B, seq=S, hidden_dim=D)
    vmem = lambda: pl.BlockSpec(memory_space=pltpu.MemorySpace.VMEM)

    # Single invocation (no grid): the whole problem fits comfortably in VMEM
    # at these shapes (x 16 KiB, fused QKV 768 KiB, FFN weights 2x256 KiB).
    # NOTE(v7x): with only one block there is no grid axis to shard across the
    # two TensorCores; at B=2, S=8 the per-step pipeline overhead saved by
    # collapsing outweighs the idle second core.
    out = pl.pallas_call(
        kernel,
        out_shape=jax.ShapeDtypeStruct((B * S, D), jnp.float32),
        in_specs=[vmem() for _ in range(7)],
        out_specs=vmem(),
    )(x2d,
      prepped["wqkv"], prepped["bqkv"],
      prepped["w1t"], prepped["b1"],
      prepped["w2t"], prepped["b2"])

    return out.reshape(B, S, D)


def init_params(key, hidden_dim):
    """Deterministic PyTorch-style Linear init: U(-1/sqrt(in), 1/sqrt(in))."""
    bound = 1.0 / math.sqrt(hidden_dim)
    names = ["wq", "bq", "wk", "bk", "wv", "bv", "w1", "b1", "w2", "b2"]
    keys = jax.random.split(key, len(names))
    params = {}
    for name, k in zip(names, keys):
        if name.startswith("w"):
            shape = (hidden_dim, hidden_dim)            # PyTorch (out, in)
        else:
            shape = (hidden_dim,)
        params[name] = jax.random.uniform(
            k, shape, jnp.float32, minval=-bound, maxval=bound)
    return params


def reference_forward(x, params):
    """Pure-JAX reference matching the PyTorch module exactly."""
    D = x.shape[-1]
    lin = lambda h, w, b: h @ jnp.asarray(w).T + b
    q = lin(x, params["wq"], params["bq"])
    k = lin(x, params["wk"], params["bk"])
    v = lin(x, params["wv"], params["bv"])
    scores = jnp.einsum("bqd,bkd->bqk", q, k) / math.sqrt(D)
    attn = jax.nn.softmax(scores, axis=-1)
    h = x + jnp.einsum("bqk,bkd->bqd", attn, v)
    f = jax.nn.relu(lin(h, params["w1"], params["b1"]))
    f = lin(f, params["w2"], params["b2"])
    return f + f                                        # module's x = x + x


if __name__ == "__main__":
    # Small shapes consistent with the module spec (hidden_dim = 256).
    B, S, D = 2, 8, 256

    key = jax.random.PRNGKey(0)
    kx, kp = jax.random.split(key)
    x = jax.random.normal(kx, (B, S, D), jnp.float32)
    params = init_params(kp, D)
    prepped = prepare_params(params)                    # hoisted, done once

    fwd = jax.jit(transformer_encoder)
    out = jax.block_until_ready(fwd(x, prepped))

    ref = reference_forward(x, params)
    assert out.shape == (B, S, D)
    max_err = float(jnp.max(jnp.abs(out - ref)))
    # tolerance accommodates the approx-reciprocal softmax normalization
    assert jnp.allclose(out, ref, atol=1e-3, rtol=1e-3), \
        f"mismatch vs reference (max abs err = {max_err})"

    print("KERNEL_OK")
</pallas_src>

<mosaic_0001>
module attributes {stable_mosaic.version = 11 : i64} {
  func.func @_encoder_kernel(%arg0: memref<16x256xf32, #tpu.memory_space<vmem>>, %arg1: memref<256x768xf32, #tpu.memory_space<vmem>>, %arg2: memref<1x768xf32, #tpu.memory_space<vmem>>, %arg3: memref<256x256xf32, #tpu.memory_space<vmem>>, %arg4: memref<1x256xf32, #tpu.memory_space<vmem>>, %arg5: memref<256x256xf32, #tpu.memory_space<vmem>>, %arg6: memref<1x256xf32, #tpu.memory_space<vmem>>, %arg7: memref<16x256xf32, #tpu.memory_space<vmem>>) attributes {dimension_semantics = [], scalar_prefetch = 0 : i64, scratch_operands = 0 : i64, tpu.core_type = #tpu.core_type<tc>} {
    %c0 = arith.constant 0 : index
    %c0_0 = arith.constant 0 : index
    %0 = vector.load %arg0[%c0, %c0_0] : memref<16x256xf32, #tpu.memory_space<vmem>>, vector<16x256xf32>
    %c0_1 = arith.constant 0 : index
    %c0_2 = arith.constant 0 : index
    %1 = vector.load %arg1[%c0_1, %c0_2] : memref<256x768xf32, #tpu.memory_space<vmem>>, vector<256x768xf32>
    %cst = arith.constant dense<0.000000e+00> : vector<16x768xf32>
    %2 = tpu.matmul %0, %1, %cst {dimension_numbers = #tpu.dot_dimension_numbers<[1], [0], [0], [1], [0, 0, 1, 1], [], []>} : vector<16x256xf32>, vector<256x768xf32>, vector<16x768xf32> -> vector<16x768xf32>
    %c0_3 = arith.constant 0 : index
    %c0_4 = arith.constant 0 : index
    %3 = vector.load %arg2[%c0_3, %c0_4] : memref<1x768xf32, #tpu.memory_space<vmem>>, vector<1x768xf32>
    %4 = vector.broadcast %3 : vector<1x768xf32> to vector<16x768xf32>
    %5 = arith.addf %2, %4 : vector<16x768xf32>
    %6 = vector.extract_strided_slice %5 {offsets = [0, 0], sizes = [16, 256], strides = [1, 1]} : vector<16x768xf32> to vector<16x256xf32>
    %7 = vector.shape_cast %6 : vector<16x256xf32> to vector<2x8x256xf32>
    %8 = vector.extract_strided_slice %5 {offsets = [0, 256], sizes = [16, 256], strides = [1, 1]} : vector<16x768xf32> to vector<16x256xf32>
    %9 = vector.shape_cast %8 : vector<16x256xf32> to vector<2x8x256xf32>
    %10 = vector.extract_strided_slice %5 {offsets = [0, 512], sizes = [16, 256], strides = [1, 1]} : vector<16x768xf32> to vector<16x256xf32>
    %11 = vector.shape_cast %10 : vector<16x256xf32> to vector<2x8x256xf32>
    %cst_5 = arith.constant dense<0.000000e+00> : vector<2x8x8xf32>
    %12 = tpu.matmul %7, %9, %cst_5 {dimension_numbers = #tpu.dot_dimension_numbers<[2], [2], [1], [1], [0, 0, 0, 1, 1, 1], [0], [0]>} : vector<2x8x256xf32>, vector<2x8x256xf32>, vector<2x8x8xf32> -> vector<2x8x8xf32>
    %cst_6 = arith.constant 6.250000e-02 : f32
    %13 = vector.broadcast %cst_6 : f32 to vector<2x8x8xf32>
    %14 = arith.mulf %12, %13 : vector<2x8x8xf32>
    %cst_7 = arith.constant dense<0xFF800000> : vector<2x8xf32>
    %15 = vector.multi_reduction <maximumf>, %14, %cst_7 [2] : vector<2x8x8xf32> to vector<2x8xf32>
    %16 = vector.shape_cast %15 : vector<2x8xf32> to vector<2x8x1xf32>
    %17 = vector.broadcast %16 : vector<2x8x1xf32> to vector<2x8x8xf32>
    %18 = arith.subf %14, %17 : vector<2x8x8xf32>
    %19 = math.exp %18 : vector<2x8x8xf32>
    %cst_8 = arith.constant dense<0.000000e+00> : vector<2x8xf32>
    %20 = vector.multi_reduction <add>, %19, %cst_8 [2] : vector<2x8x8xf32> to vector<2x8xf32>
    %21 = vector.shape_cast %20 : vector<2x8xf32> to vector<2x8x1xf32>
    %cst_9 = arith.constant dense<0.000000e+00> : vector<2x8x256xf32>
    %22 = tpu.matmul %19, %11, %cst_9 {dimension_numbers = #tpu.dot_dimension_numbers<[2], [1], [1], [2], [0, 0, 0, 1, 1, 2], [0], [0]>} : vector<2x8x8xf32>, vector<2x8x256xf32>, vector<2x8x256xf32> -> vector<2x8x256xf32>
    %23 = tpu.reciprocal %21 {approx = true} : vector<2x8x1xf32> -> vector<2x8x1xf32>
    %24 = vector.broadcast %23 : vector<2x8x1xf32> to vector<2x8x256xf32>
    %25 = arith.mulf %22, %24 : vector<2x8x256xf32>
    %26 = vector.shape_cast %25 : vector<2x8x256xf32> to vector<16x256xf32>
    %27 = arith.addf %0, %26 : vector<16x256xf32>
    %c0_10 = arith.constant 0 : index
    %c0_11 = arith.constant 0 : index
    %28 = vector.load %arg3[%c0_10, %c0_11] : memref<256x256xf32, #tpu.memory_space<vmem>>, vector<256x256xf32>
    %cst_12 = arith.constant dense<0.000000e+00> : vector<16x256xf32>
    %29 = tpu.matmul %27, %28, %cst_12 {dimension_numbers = #tpu.dot_dimension_numbers<[1], [0], [0], [1], [0, 0, 1, 1], [], []>} : vector<16x256xf32>, vector<256x256xf32>, vector<16x256xf32> -> vector<16x256xf32>
    %c0_13 = arith.constant 0 : index
    %c0_14 = arith.constant 0 : index
    %30 = vector.load %arg4[%c0_13, %c0_14] : memref<1x256xf32, #tpu.memory_space<vmem>>, vector<1x256xf32>
    %31 = vector.broadcast %30 : vector<1x256xf32> to vector<16x256xf32>
    %32 = arith.addf %29, %31 : vector<16x256xf32>
    %cst_15 = arith.constant 0.000000e+00 : f32
    %33 = vector.broadcast %cst_15 : f32 to vector<16x256xf32>
    %34 = arith.maximumf %32, %33 : vector<16x256xf32>
    %c0_16 = arith.constant 0 : index
    %c0_17 = arith.constant 0 : index
    %35 = vector.load %arg5[%c0_16, %c0_17] : memref<256x256xf32, #tpu.memory_space<vmem>>, vector<256x256xf32>
    %cst_18 = arith.constant dense<0.000000e+00> : vector<16x256xf32>
    %36 = tpu.matmul %34, %35, %cst_18 {dimension_numbers = #tpu.dot_dimension_numbers<[1], [0], [0], [1], [0, 0, 1, 1], [], []>} : vector<16x256xf32>, vector<256x256xf32>, vector<16x256xf32> -> vector<16x256xf32>
    %c0_19 = arith.constant 0 : index
    %c0_20 = arith.constant 0 : index
    %37 = vector.load %arg6[%c0_19, %c0_20] : memref<1x256xf32, #tpu.memory_space<vmem>>, vector<1x256xf32>
    %38 = vector.broadcast %37 : vector<1x256xf32> to vector<16x256xf32>
    %39 = arith.addf %36, %38 : vector<16x256xf32>
    %40 = arith.addf %39, %39 : vector<16x256xf32>
    %c0_21 = arith.constant 0 : index
    %c0_22 = arith.constant 0 : index
    %41 = vector.load %arg7[%c0_21, %c0_22] : memref<16x256xf32, #tpu.memory_space<vmem>>, vector<16x256xf32>
    tpu.vector_store %arg7[%c0_21, %c0_22], %40 {strides = array<i32>} : memref<16x256xf32, #tpu.memory_space<vmem>>, vector<16x256xf32>,
    return
  }
}

</mosaic_0001>

<llo_original>
// kernel: transformer_encoder.1
$region0: #{transformer_encoder.1}
  #allocation0 [shape = 'u32[]', space=smem, size = 0x4, offset = 0x4, fixed_abs, tag = 'smem constant byte address 0x4 - core index']
  #allocation1 [shape = 'u32[144,128]{1,0:T(1,128)}', space=vmem, size = 0x12000, scoped, tag = 'internal scratch']
  %s0 = inlined_call_operand.hbm [shape: f32[16,256], index: 0, kind: input, shape index: {}]
  %s1 = inlined_call_operand.hbm [shape: f32[256,768], index: 1, kind: input, shape index: {}]
  %s2 = inlined_call_operand.vmem [shape: f32[1,768], index: 2, kind: input, shape index: {}]
  %s3 = inlined_call_operand.hbm [shape: f32[256,256], index: 3, kind: input, shape index: {}]
  %s4 = inlined_call_operand.vmem [shape: f32[1,256], index: 4, kind: input, shape index: {}]
  %s5 = inlined_call_operand.hbm [shape: f32[256,256], index: 5, kind: input, shape index: {}]
  %s6 = inlined_call_operand.vmem [shape: f32[1,256], index: 6, kind: input, shape index: {}]
  %s7 = inlined_call_operand.hbm [shape: f32[16,256], index: 7, kind: output, shape index: {}]
  %s8 = sld [smem:[#allocation0]]
  $region54: #{transformer_encoder.1} parent=0
    _
  %s10 = ssub.s32 1, %s8
  %s11 = scalar_select 0, %s10, %s8
  $region1: #{transformer_encoder.1} parent=0
    #allocation2 [shape = 'u8[16384]{0}', space=vmem, size = 0x4000, scoped, tag = 'input window, operand 0, single buffered']
    #allocation3 [shape = 's32[1]{0}', space=sflag, size = 0x4, scoped, tag = 'scoped memory for transformer_encoder.1']
    #allocation4 [shape = 's32[1]{0}', space=sflag, size = 0x4, scoped, tag = 'scoped memory for transformer_encoder.1']
    #allocation5 [shape = 'u8[786432]{0}', space=vmem, size = 0xc0000, scoped, tag = 'input window, operand 1, single buffered']
    #allocation6 [shape = 's32[1]{0}', space=sflag, size = 0x4, scoped, tag = 'scoped memory for transformer_encoder.1']
    #allocation7 [shape = 'u8[262144]{0}', space=vmem, size = 0x40000, scoped, tag = 'input window, operand 3, single buffered']
    #allocation8 [shape = 'u8[262144]{0}', space=vmem, size = 0x40000, scoped, tag = 'input window, operand 5, single buffered']
    #allocation9 [shape = 's32[1]{0}', space=sflag, size = 0x4, scoped, tag = 'scoped memory for transformer_encoder.1']
    #allocation10 [shape = 'u8[16384]{0}', space=vmem, size = 0x4000, scoped, tag = 'output window, operand 0, single buffered']
    %12 = vsyncpa [#allocation3], 0
    %13 = vsyncpa [#allocation6], 0
    %14 = vsyncpa [#allocation9], 0
    %15 = vsyncpa [#allocation4], 0
    // Predicated region
    $region2: #{transformer_encoder.1} parent=1 // pred_check
      _
    $region3: #{transformer_encoder.1} parent=1 // pred_check_branch
      %17 = sbr.rel (0) target = $region5
    $region4: #{transformer_encoder.1} parent=1 // pred_region
      %s19 = ssub.s32 512, 512
      %20 = vsyncadd [#allocation3], %s19
      %s21 = sshll.u32 [#allocation2], 4
      %s22 = int_to_ptr.vmem [resolvable:$true] %s21
      %27 = dma.hbm_to_vmem [thread:$0]  %s0, 512, %s22, [#allocation3], 256, 256, 16
    $region5: #{transformer_encoder.1} parent=1 // pred_fallthru
      _
    // Predicated region
    $region6: #{transformer_encoder.1} parent=1 // pred_check
      _
    $region7: #{transformer_encoder.1} parent=1 // pred_check_branch
      %29 = sbr.rel (0) target = $region9
    $region8: #{transformer_encoder.1} parent=1 // pred_region
      %s31 = ssub.s32 24576, 24576
      %32 = vsyncadd [#allocation6], %s31
      %s33 = sshll.u32 [#allocation5], 4
      %s34 = int_to_ptr.vmem [resolvable:$true] %s33
      %39 = dma.hbm_to_vmem [thread:$0]  %s1, 24576, %s34, [#allocation6], 768, 768, 48
    $region9: #{transformer_encoder.1} parent=1 // pred_fallthru
      _
    // Predicated region
    $region10: #{transformer_encoder.1} parent=1 // pred_check
      _
    $region11: #{transformer_encoder.1} parent=1 // pred_check_branch
      %41 = sbr.rel (0) target = $region13
    $region12: #{transformer_encoder.1} parent=1 // pred_region
      _
    $region13: #{transformer_encoder.1} parent=1 // pred_fallthru
      _
    // Predicated region
    $region14: #{transformer_encoder.1} parent=1 // pred_check
      _
    $region15: #{transformer_encoder.1} parent=1 // pred_check_branch
      %43 = sbr.rel (0) target = $region17
    $region16: #{transformer_encoder.1} parent=1 // pred_region
      %s45 = ssub.s32 8192, 8192
      %46 = vsyncadd [#allocation6], %s45
      %s47 = sshll.u32 [#allocation7], 4
      %s48 = int_to_ptr.vmem [resolvable:$true] %s47
      %53 = dma.hbm_to_vmem [thread:$0]  %s3, 8192, %s48, [#allocation6], 256, 256, 16
    $region17: #{transformer_encoder.1} parent=1 // pred_fallthru
      _
    // Predicated region
    $region18: #{transformer_encoder.1} parent=1 // pred_check
      _
    $region19: #{transformer_encoder.1} parent=1 // pred_check_branch
      %55 = sbr.rel (0) target = $region21
    $region20: #{transformer_encoder.1} parent=1 // pred_region
      _
    $region21: #{transformer_encoder.1} parent=1 // pred_fallthru
      _
    // Predicated region
    $region22: #{transformer_encoder.1} parent=1 // pred_check
      _
    $region23: #{transformer_encoder.1} parent=1 // pred_check_branch
      %57 = sbr.rel (0) target = $region25
    $region24: #{transformer_encoder.1} parent=1 // pred_region
      %s59 = ssub.s32 8192, 8192
      %60 = vsyncadd [#allocation9], %s59
      %s61 = sshll.u32 [#allocation8], 4
      %s62 = int_to_ptr.vmem [resolvable:$true] %s61
      %67 = dma.hbm_to_vmem [thread:$0]  %s5, 8192, %s62, [#allocation9], 256, 256, 16
    $region25: #{transformer_encoder.1} parent=1 // pred_fallthru
      _
    // Predicated region
    $region26: #{transformer_encoder.1} parent=1 // pred_check
      _
    $region27: #{transformer_encoder.1} parent=1 // pred_check_branch
      %69 = sbr.rel (0) target = $region29
    $region28: #{transformer_encoder.1} parent=1 // pred_region
      _
    $region29: #{transformer_encoder.1} parent=1 // pred_fallthru
      _
    // Predicated region
    $region30: #{transformer_encoder.1} parent=1 // pred_check
      _
    $region31: #{transformer_encoder.1} parent=1 // pred_check_branch
      %71 = sbr.rel (0) target = $region33
    $region32: #{transformer_encoder.1} parent=1 // pred_region
      %72 = dma.done [#allocation3], 512
    $region33: #{transformer_encoder.1} parent=1 // pred_fallthru
      _
    // Predicated region
    $region34: #{transformer_encoder.1} parent=1 // pred_check
      _
    $region35: #{transformer_encoder.1} parent=1 // pred_check_branch
      %74 = sbr.rel (0) target = $region37
    $region36: #{transformer_encoder.1} parent=1 // pred_region
      %75 = dma.done [#allocation6], 24576
    $region37: #{transformer_encoder.1} parent=1 // pred_fallthru
      _
    // Predicated region
    $region38: #{transformer_encoder.1} parent=1 // pred_check
      _
    $region39: #{transformer_encoder.1} parent=1 // pred_check_branch
      %77 = sbr.rel (0) target = $region41
    $region40: #{transformer_encoder.1} parent=1 // pred_region
      %78 = dma.done [#allocation6], 8192
    $region41: #{transformer_encoder.1} parent=1 // pred_fallthru
      _
    // Predicated region
    $region42: #{transformer_encoder.1} parent=1 // pred_check
      _
    $region43: #{transformer_encoder.1} parent=1 // pred_check_branch
      %80 = sbr.rel (0) target = $region45
    $region44: #{transformer_encoder.1} parent=1 // pred_region
      %81 = dma.done [#allocation9], 8192
    $region45: #{transformer_encoder.1} parent=1 // pred_fallthru
      _
    %v82 = vld [vmem:[#allocation2] sm:$0xff]
    %v83 = vld [vmem:[#allocation2 + $0x8] sm:$0xff]
    %v84 = vld [vmem:[#allocation2 + $0x10] sm:$0xff]
    %v85 = vld [vmem:[#allocation2 + $0x18] sm:$0xff]
    %v86 = vld [vmem:[#allocation5] sm:$0xff]
    %v87 = vld [vmem:[#allocation5 + $0x8] sm:$0xff]
    %v88 = vld [vmem:[#allocation5 + $0x10] sm:$0xff]
    %v89 = vld [vmem:[#allocation5 + $0x18] sm:$0xff]
    %v90 = vld [vmem:[#allocation5 + $0x20] sm:$0xff]
    %v91 = vld [vmem:[#allocation5 + $0x28] sm:$0xff]
    %v92 = vld [vmem:[#allocation5 + $0x30] sm:$0xff]
    %v93 = vld [vmem:[#allocation5 + $0x38] sm:$0xff]
    %v94 = vld [vmem:[#allocation5 + $0x40] sm:$0xff]
    %v95 = vld [vmem:[#allocation5 + $0x48] sm:$0xff]
    %v96 = vld [vmem:[#allocation5 + $0x50] sm:$0xff]
    %v97 = vld [vmem:[#allocation5 + $0x58] sm:$0xff]
    %v98 = vld [vmem:[#allocation5 + $0x60] sm:$0xff]
    %v99 = vld [vmem:[#allocation5 + $0x68] sm:$0xff]
    %v100 = vld [vmem:[#allocation5 + $0x70] sm:$0xff]
    %v101 = vld [vmem:[#allocation5 + $0x78] sm:$0xff]
    %v102 = vld [vmem:[#allocation5 + $0x80] sm:$0xff]
    %v103 = vld [vmem:[#allocation5 + $0x88] sm:$0xff]
    %v104 = vld [vmem:[#allocation5 + $0x90] sm:$0xff]
    %v105 = vld [vmem:[#allocation5 + $0x98] sm:$0xff]
    %v106 = vld [vmem:[#allocation5 + $0xa0] sm:$0xff]
    %v107 = vld [vmem:[#allocation5 + $0xa8] sm:$0xff]
    %v108 = vld [vmem:[#allocation5 + $0xb0] sm:$0xff]
    %v109 = vld [vmem:[#allocation5 + $0xb8] sm:$0xff]
    %v110 = vld [vmem:[#allocation5 + $0xc0] sm:$0xff]
    %v111 = vld [vmem:[#allocation5 + $0xc8] sm:$0xff]
    %v112 = vld [vmem:[#allocation5 + $0xd0] sm:$0xff]
    %v113 = vld [vmem:[#allocation5 + $0xd8] sm:$0xff]
    %v114 = vld [vmem:[#allocation5 + $0xe0] sm:$0xff]
    %v115 = vld [vmem:[#allocation5 + $0xe8] sm:$0xff]
    %v116 = vld [vmem:[#allocation5 + $0xf0] sm:$0xff]
    %v117 = vld [vmem:[#allocation5 + $0xf8] sm:$0xff]
    %v118 = vld [vmem:[#allocation5 + $0x100] sm:$0xff]
    %v119 = vld [vmem:[#allocation5 + $0x108] sm:$0xff]
    %v120 = vld [vmem:[#allocation5 + $0x110] sm:$0xff]
    %v121 = vld [vmem:[#allocation5 + $0x118] sm:$0xff]
    %v122 = vld [vmem:[#allocation5 + $0x120] sm:$0xff]
    %v123 = vld [vmem:[#allocation5 + $0x128] sm:$0xff]
    %v124 = vld [vmem:[#allocation5 + $0x130] sm:$0xff]
    %v125 = vld [vmem:[#allocation5 + $0x138] sm:$0xff]
    %v126 = vld [vmem:[#allocation5 + $0x140] sm:$0xff]
    %v127 = vld [vmem:[#allocation5 + $0x148] sm:$0xff]
    %v128 = vld [vmem:[#allocation5 + $0x150] sm:$0xff]
    %v129 = vld [vmem:[#allocation5 + $0x158] sm:$0xff]
    %v130 = vld [vmem:[#allocation5 + $0x160] sm:$0xff]
    %v131 = vld [vmem:[#allocation5 + $0x168] sm:$0xff]
    %v132 = vld [vmem:[#allocation5 + $0x170] sm:$0xff]
    %v133 = vld [vmem:[#allocation5 + $0x178] sm:$0xff]
    %v134 = vld [vmem:[#allocation5 + $0x180] sm:$0xff]
    %v135 = vld [vmem:[#allocation5 + $0x188] sm:$0xff]
    %v136 = vld [vmem:[#allocation5 + $0x190] sm:$0xff]
    %v137 = vld [vmem:[#allocation5 + $0x198] sm:$0xff]
    %v138 = vld [vmem:[#allocation5 + $0x1a0] sm:$0xff]
    %v139 = vld [vmem:[#allocation5 + $0x1a8] sm:$0xff]
    %v140 = vld [vmem:[#allocation5 + $0x1b0] sm:$0xff]
    %v141 = vld [vmem:[#allocation5 + $0x1b8] sm:$0xff]
    %v142 = vld [vmem:[#allocation5 + $0x1c0] sm:$0xff]
    %v143 = vld [vmem:[#allocation5 + $0x1c8] sm:$0xff]
    %v144 = vld [vmem:[#allocation5 + $0x1d0] sm:$0xff]
    %v145 = vld [vmem:[#allocation5 + $0x1d8] sm:$0xff]
    %v146 = vld [vmem:[#allocation5 + $0x1e0] sm:$0xff]
    %v147 = vld [vmem:[#allocation5 + $0x1e8] sm:$0xff]
    %v148 = vld [vmem:[#allocation5 + $0x1f0] sm:$0xff]
    %v149 = vld [vmem:[#allocation5 + $0x1f8] sm:$0xff]
    %v150 = vld [vmem:[#allocation5 + $0x200] sm:$0xff]
    %v151 = vld [vmem:[#allocation5 + $0x208] sm:$0xff]
    %v152 = vld [vmem:[#allocation5 + $0x210] sm:$0xff]
    %v153 = vld [vmem:[#allocation5 + $0x218] sm:$0xff]
    %v154 = vld [vmem:[#allocation5 + $0x220] sm:$0xff]
    %v155 = vld [vmem:[#allocation5 + $0x228] sm:$0xff]
    %v156 = vld [vmem:[#allocation5 + $0x230] sm:$0xff]
    %v157 = vld [vmem:[#allocation5 + $0x238] sm:$0xff]
    %v158 = vld [vmem:[#allocation5 + $0x240] sm:$0xff]
    %v159 = vld [vmem:[#allocation5 + $0x248] sm:$0xff]
    %v160 = vld [vmem:[#allocation5 + $0x250] sm:$0xff]
    %v161 = vld [vmem:[#allocation5 + $0x258] sm:$0xff]
    %v162 = vld [vmem:[#allocation5 + $0x260] sm:$0xff]
    %v163 = vld [vmem:[#allocation5 + $0x268] sm:$0xff]
    %v164 = vld [vmem:[#allocation5 + $0x270] sm:$0xff]
    %v165 = vld [vmem:[#allocation5 + $0x278] sm:$0xff]
    %v166 = vld [vmem:[#allocation5 + $0x280] sm:$0xff]
    %v167 = vld [vmem:[#allocation5 + $0x288] sm:$0xff]
    %v168 = vld [vmem:[#allocation5 + $0x290] sm:$0xff]
    %v169 = vld [vmem:[#allocation5 + $0x298] sm:$0xff]
    %v170 = vld [vmem:[#allocation5 + $0x2a0] sm:$0xff]
    %v171 = vld [vmem:[#allocation5 + $0x2a8] sm:$0xff]
    %v172 = vld [vmem:[#allocation5 + $0x2b0] sm:$0xff]
    %v173 = vld [vmem:[#allocation5 + $0x2b8] sm:$0xff]
    %v174 = vld [vmem:[#allocation5 + $0x2c0] sm:$0xff]
    %v175 = vld [vmem:[#allocation5 + $0x2c8] sm:$0xff]
    %v176 = vld [vmem:[#allocation5 + $0x2d0] sm:$0xff]
    %v177 = vld [vmem:[#allocation5 + $0x2d8] sm:$0xff]
    %v178 = vld [vmem:[#allocation5 + $0x2e0] sm:$0xff]
    %v179 = vld [vmem:[#allocation5 + $0x2e8] sm:$0xff]
    %v180 = vld [vmem:[#allocation5 + $0x2f0] sm:$0xff]
    %v181 = vld [vmem:[#allocation5 + $0x2f8] sm:$0xff]
    %v182 = vld [vmem:[#allocation5 + $0x300] sm:$0xff]
    %v183 = vld [vmem:[#allocation5 + $0x308] sm:$0xff]
    %v184 = vld [vmem:[#allocation5 + $0x310] sm:$0xff]
    %v185 = vld [vmem:[#allocation5 + $0x318] sm:$0xff]
    %v186 = vld [vmem:[#allocation5 + $0x320] sm:$0xff]
    %v187 = vld [vmem:[#allocation5 + $0x328] sm:$0xff]
    %v188 = vld [vmem:[#allocation5 + $0x330] sm:$0xff]
    %v189 = vld [vmem:[#allocation5 + $0x338] sm:$0xff]
    %v190 = vld [vmem:[#allocation5 + $0x340] sm:$0xff]
    %v191 = vld [vmem:[#allocation5 + $0x348] sm:$0xff]
    %v192 = vld [vmem:[#allocation5 + $0x350] sm:$0xff]
    %v193 = vld [vmem:[#allocation5 + $0x358] sm:$0xff]
    %v194 = vld [vmem:[#allocation5 + $0x360] sm:$0xff]
    %v195 = vld [vmem:[#allocation5 + $0x368] sm:$0xff]
    %v196 = vld [vmem:[#allocation5 + $0x370] sm:$0xff]
    %v197 = vld [vmem:[#allocation5 + $0x378] sm:$0xff]
    %v198 = vld [vmem:[#allocation5 + $0x380] sm:$0xff]
    %v199 = vld [vmem:[#allocation5 + $0x388] sm:$0xff]
    %v200 = vld [vmem:[#allocation5 + $0x390] sm:$0xff]
    %v201 = vld [vmem:[#allocation5 + $0x398] sm:$0xff]
    %v202 = vld [vmem:[#allocation5 + $0x3a0] sm:$0xff]
    %v203 = vld [vmem:[#allocation5 + $0x3a8] sm:$0xff]
    %v204 = vld [vmem:[#allocation5 + $0x3b0] sm:$0xff]
    %v205 = vld [vmem:[#allocation5 + $0x3b8] sm:$0xff]
    %v206 = vld [vmem:[#allocation5 + $0x3c0] sm:$0xff]
    %v207 = vld [vmem:[#allocation5 + $0x3c8] sm:$0xff]
    %v208 = vld [vmem:[#allocation5 + $0x3d0] sm:$0xff]
    %v209 = vld [vmem:[#allocation5 + $0x3d8] sm:$0xff]
    %v210 = vld [vmem:[#allocation5 + $0x3e0] sm:$0xff]
    %v211 = vld [vmem:[#allocation5 + $0x3e8] sm:$0xff]
    %v212 = vld [vmem:[#allocation5 + $0x3f0] sm:$0xff]
    %v213 = vld [vmem:[#allocation5 + $0x3f8] sm:$0xff]
    %v214 = vld [vmem:[#allocation5 + $0x400] sm:$0xff]
    %v215 = vld [vmem:[#allocation5 + $0x408] sm:$0xff]
    %v216 = vld [vmem:[#allocation5 + $0x410] sm:$0xff]
    %v217 = vld [vmem:[#allocation5 + $0x418] sm:$0xff]
    %v218 = vld [vmem:[#allocation5 + $0x420] sm:$0xff]
    %v219 = vld [vmem:[#allocation5 + $0x428] sm:$0xff]
    %v220 = vld [vmem:[#allocation5 + $0x430] sm:$0xff]
    %v221 = vld [vmem:[#allocation5 + $0x438] sm:$0xff]
    %v222 = vld [vmem:[#allocation5 + $0x440] sm:$0xff]
    %v223 = vld [vmem:[#allocation5 + $0x448] sm:$0xff]
    %v224 = vld [vmem:[#allocation5 + $0x450] sm:$0xff]
    %v225 = vld [vmem:[#allocation5 + $0x458] sm:$0xff]
    %v226 = vld [vmem:[#allocation5 + $0x460] sm:$0xff]
    %v227 = vld [vmem:[#allocation5 + $0x468] sm:$0xff]
    %v228 = vld [vmem:[#allocation5 + $0x470] sm:$0xff]
    %v229 = vld [vmem:[#allocation5 + $0x478] sm:$0xff]
    %v230 = vld [vmem:[#allocation5 + $0x480] sm:$0xff]
    %v231 = vld [vmem:[#allocation5 + $0x488] sm:$0xff]
    %v232 = vld [vmem:[#allocation5 + $0x490] sm:$0xff]
    %v233 = vld [vmem:[#allocation5 + $0x498] sm:$0xff]
    %v234 = vld [vmem:[#allocation5 + $0x4a0] sm:$0xff]
    %v235 = vld [vmem:[#allocation5 + $0x4a8] sm:$0xff]
    %v236 = vld [vmem:[#allocation5 + $0x4b0] sm:$0xff]
    %v237 = vld [vmem:[#allocation5 + $0x4b8] sm:$0xff]
    %v238 = vld [vmem:[#allocation5 + $0x4c0] sm:$0xff]
    %v239 = vld [vmem:[#allocation5 + $0x4c8] sm:$0xff]
    %v240 = vld [vmem:[#allocation5 + $0x4d0] sm:$0xff]
    %v241 = vld [vmem:[#allocation5 + $0x4d8] sm:$0xff]
    %v242 = vld [vmem:[#allocation5 + $0x4e0] sm:$0xff]
    %v243 = vld [vmem:[#allocation5 + $0x4e8] sm:$0xff]
    %v244 = vld [vmem:[#allocation5 + $0x4f0] sm:$0xff]
    %v245 = vld [vmem:[#allocation5 + $0x4f8] sm:$0xff]
    %v246 = vld [vmem:[#allocation5 + $0x500] sm:$0xff]
    %v247 = vld [vmem:[#allocation5 + $0x508] sm:$0xff]
    %v248 = vld [vmem:[#allocation5 + $0x510] sm:$0xff]
    %v249 = vld [vmem:[#allocation5 + $0x518] sm:$0xff]
    %v250 = vld [vmem:[#allocation5 + $0x520] sm:$0xff]
    %v251 = vld [vmem:[#allocation5 + $0x528] sm:$0xff]
    %v252 = vld [vmem:[#allocation5 + $0x530] sm:$0xff]
    %v253 = vld [vmem:[#allocation5 + $0x538] sm:$0xff]
    %v254 = vld [vmem:[#allocation5 + $0x540] sm:$0xff]
    %v255 = vld [vmem:[#allocation5 + $0x548] sm:$0xff]
    %v256 = vld [vmem:[#allocation5 + $0x550] sm:$0xff]
    %v257 = vld [vmem:[#allocation5 + $0x558] sm:$0xff]
    %v258 = vld [vmem:[#allocation5 + $0x560] sm:$0xff]
    %v259 = vld [vmem:[#allocation5 + $0x568] sm:$0xff]
    %v260 = vld [vmem:[#allocation5 + $0x570] sm:$0xff]
    %v261 = vld [vmem:[#allocation5 + $0x578] sm:$0xff]
    %v262 = vld [vmem:[#allocation5 + $0x580] sm:$0xff]
    %v263 = vld [vmem:[#allocation5 + $0x588] sm:$0xff]
    %v264 = vld [vmem:[#allocation5 + $0x590] sm:$0xff]
    %v265 = vld [vmem:[#allocation5 + $0x598] sm:$0xff]
    %v266 = vld [vmem:[#allocation5 + $0x5a0] sm:$0xff]
    %v267 = vld [vmem:[#allocation5 + $0x5a8] sm:$0xff]
    %v268 = vld [vmem:[#allocation5 + $0x5b0] sm:$0xff]
    %v269 = vld [vmem:[#allocation5 + $0x5b8] sm:$0xff]
    %v270 = vld [vmem:[#allocation5 + $0x5c0] sm:$0xff]
    %v271 = vld [vmem:[#allocation5 + $0x5c8] sm:$0xff]
    %v272 = vld [vmem:[#allocation5 + $0x5d0] sm:$0xff]
    %v273 = vld [vmem:[#allocation5 + $0x5d8] sm:$0xff]
    %v274 = vld [vmem:[#allocation5 + $0x5e0] sm:$0xff]
    %v275 = vld [vmem:[#allocation5 + $0x5e8] sm:$0xff]
    %v276 = vld [vmem:[#allocation5 + $0x5f0] sm:$0xff]
    %v277 = vld [vmem:[#allocation5 + $0x5f8] sm:$0xff]
    %v278 = vld [vmem:[%s2] sm:$0x3f]
    %v280 = vlaneseq
    %v281 = vshrl.u32 %v280, 7
    %v282 = vsub.s32 0, %v281
    %v283 = vrot.slane %v278, %v282
    %v284 = vlaneseq
    %v285 = vshrl.u32 %v284, 7
    %v286 = vsub.s32 1, %v285
    %v287 = vrot.slane %v278, %v286
    %v288 = vlaneseq
    %v289 = vshrl.u32 %v288, 7
    %v290 = vsub.s32 2, %v289
    %v291 = vrot.slane %v278, %v290
    %v292 = vlaneseq
    %v293 = vshrl.u32 %v292, 7
    %v294 = vsub.s32 3, %v293
    %v295 = vrot.slane %v278, %v294
    %v296 = vlaneseq
    %v297 = vshrl.u32 %v296, 7
    %v298 = vsub.s32 4, %v297
    %v299 = vrot.slane %v278, %v298
    %v300 = vlaneseq
    %v301 = vshrl.u32 %v300, 7
    %v302 = vsub.s32 5, %v301
    %v303 = vrot.slane %v278, %v302
    %310 = vmatprep.subr.mxu0 %v87
    %311 = vmatpush1.msra.mxu0 %v86
    %312 = vmatprep.subr.mxu0 %v93
    %313 = vmatpush1.msra.mxu0 %v92
    %314 = vmatprep.subr.mxu0 %v99
    %315 = vmatpush1.msra.mxu0 %v98
    %316 = vmatprep.subr.mxu0 %v105
    %317 = vmatpush1.msra.mxu0 %v104
    %318 = vmatprep.subr.mxu0 %v111
    %319 = vmatpush1.msra.mxu0 %v110
    %320 = vmatprep.subr.mxu0 %v117
    %321 = vmatpush1.msra.mxu0 %v116
    %322 = vmatprep.subr.mxu0 %v123
    %323 = vmatpush1.msra.mxu0 %v122
    %324 = vmatprep.subr.mxu0 %v129
    %325 = vmatpush1.msra.mxu0 %v128
    %326 = vmatprep.subr.mxu0 %v135
    %327 = vmatpush1.msra.mxu0 %v134
    %328 = vmatprep.subr.mxu0 %v141
    %329 = vmatpush1.msra.mxu0 %v140
    %330 = vmatprep.subr.mxu0 %v147
    %331 = vmatpush1.msra.mxu0 %v146
    %332 = vmatprep.subr.mxu0 %v153
    %333 = vmatpush1.msra.mxu0 %v152
    %334 = vmatprep.subr.mxu0 %v159
    %335 = vmatpush1.msra.mxu0 %v158
    %336 = vmatprep.subr.mxu0 %v165
    %337 = vmatpush1.msra.mxu0 %v164
    %338 = vmatprep.subr.mxu0 %v171
    %339 = vmatpush1.msra.mxu0 %v170
    %340 = vmatprep.subr.mxu0 %v177
    %341 = vmatpush1.msra.mxu0 %v176
    %342 = vmatprep.subr.mxu0 %v183
    %343 = vmatpush1.msra.mxu0 %v182
    %344 = vmatprep.subr.mxu0 %v189
    %345 = vmatpush1.msra.mxu0 %v188
    %346 = vmatprep.subr.mxu0 %v195
    %347 = vmatpush1.msra.mxu0 %v194
    %348 = vmatprep.subr.mxu0 %v201
    %349 = vmatpush1.msra.mxu0 %v200
    %350 = vmatprep.subr.mxu0 %v207
    %351 = vmatpush1.msra.mxu0 %v206
    %352 = vmatprep.subr.mxu0 %v213
    %353 = vmatpush1.msra.mxu0 %v212
    %354 = vmatprep.subr.mxu0 %v219
    %355 = vmatpush1.msra.mxu0 %v218
    %356 = vmatprep.subr.mxu0 %v225
    %357 = vmatpush1.msra.mxu0 %v224
    %358 = vmatprep.subr.mxu0 %v231
    %359 = vmatpush1.msra.mxu0 %v230
    %360 = vmatprep.subr.mxu0 %v237
    %361 = vmatpush1.msra.mxu0 %v236
    %362 = vmatprep.subr.mxu0 %v243
    %363 = vmatpush1.msra.mxu0 %v242
    %364 = vmatprep.subr.mxu0 %v249
    %365 = vmatpush1.msra.mxu0 %v248
    %366 = vmatprep.subr.mxu0 %v255
    %367 = vmatpush1.msra.mxu0 %v254
    %368 = vmatprep.subr.mxu0 %v261
    %369 = vmatpush1.msra.mxu0 %v260
    %370 = vmatprep.subr.mxu0 %v267
    %371 = vmatpush1.msra.mxu0 %v266
    %372 = vmatprep.subr.mxu0 %v273
    %373 = vmatpush1.msra.mxu0 %v272
    %374 = vmatprep.mubr.f32.mxu0 %v83
    %375 = vmatmul.mubr.f32.gmra.mrb[0].mxu0 %v82
    %v376 = vpop.f32.mrb[0].mxu0
    %v377 = vadd.f32 %v283, %v376
    %v378 = vpop.f32.mrb[0].mxu0
    %v379 = vadd.f32 %v287, %v378
    %380 = vmatprep.mubr.f32.mxu0 %v85
    %381 = vmatmul.mubr.f32.gmra.mrb[0].mxu0 %v84
    %v382 = vpop.f32.mrb[0].mxu0
    %v383 = vadd.f32 %v283, %v382
    %v384 = vpop.f32.mrb[0].mxu0
    %v385 = vadd.f32 %v287, %v384
    %386 = vdwg.mxu0
    %387 = vmatprep.subr.mxu0 %v89
    %388 = vmatpush1.msra.mxu0 %v88
    %389 = vmatprep.subr.mxu0 %v95
    %390 = vmatpush1.msra.mxu0 %v94
    %391 = vmatprep.subr.mxu0 %v101
    %392 = vmatpush1.msra.mxu0 %v100
    %393 = vmatprep.subr.mxu0 %v107
    %394 = vmatpush1.msra.mxu0 %v106
    %395 = vmatprep.subr.mxu0 %v113
    %396 = vmatpush1.msra.mxu0 %v112
    %397 = vmatprep.subr.mxu0 %v119
    %398 = vmatpush1.msra.mxu0 %v118
    %399 = vmatprep.subr.mxu0 %v125
    %400 = vmatpush1.msra.mxu0 %v124
    %401 = vmatprep.subr.mxu0 %v131
    %402 = vmatpush1.msra.mxu0 %v130
    %403 = vmatprep.subr.mxu0 %v137
    %404 = vmatpush1.msra.mxu0 %v136
    %405 = vmatprep.subr.mxu0 %v143
    %406 = vmatpush1.msra.mxu0 %v142
    %407 = vmatprep.subr.mxu0 %v149
    %408 = vmatpush1.msra.mxu0 %v148
    %409 = vmatprep.subr.mxu0 %v155
    %410 = vmatpush1.msra.mxu0 %v154
    %411 = vmatprep.subr.mxu0 %v161
    %412 = vmatpush1.msra.mxu0 %v160
    %413 = vmatprep.subr.mxu0 %v167
    %414 = vmatpush1.msra.mxu0 %v166
    %415 = vmatprep.subr.mxu0 %v173
    %416 = vmatpush1.msra.mxu0 %v172
    %417 = vmatprep.subr.mxu0 %v179
    %418 = vmatpush1.msra.mxu0 %v178
    %419 = vmatprep.subr.mxu0 %v185
    %420 = vmatpush1.msra.mxu0 %v184
    %421 = vmatprep.subr.mxu0 %v191
    %422 = vmatpush1.msra.mxu0 %v190
    %423 = vmatprep.subr.mxu0 %v197
    %424 = vmatpush1.msra.mxu0 %v196
    %425 = vmatprep.subr.mxu0 %v203
    %426 = vmatpush1.msra.mxu0 %v202
    %427 = vmatprep.subr.mxu0 %v209
    %428 = vmatpush1.msra.mxu0 %v208
    %429 = vmatprep.subr.mxu0 %v215
    %430 = vmatpush1.msra.mxu0 %v214
    %431 = vmatprep.subr.mxu0 %v221
    %432 = vmatpush1.msra.mxu0 %v220
    %433 = vmatprep.subr.mxu0 %v227
    %434 = vmatpush1.msra.mxu0 %v226
    %435 = vmatprep.subr.mxu0 %v233
    %436 = vmatpush1.msra.mxu0 %v232
    %437 = vmatprep.subr.mxu0 %v239
    %438 = vmatpush1.msra.mxu0 %v238
    %439 = vmatprep.subr.mxu0 %v245
    %440 = vmatpush1.msra.mxu0 %v244
    %441 = vmatprep.subr.mxu0 %v251
    %442 = vmatpush1.msra.mxu0 %v250
    %443 = vmatprep.subr.mxu0 %v257
    %444 = vmatpush1.msra.mxu0 %v256
    %445 = vmatprep.subr.mxu0 %v263
    %446 = vmatpush1.msra.mxu0 %v262
    %447 = vmatprep.subr.mxu0 %v269
    %448 = vmatpush1.msra.mxu0 %v268
    %449 = vmatprep.subr.mxu0 %v275
    %450 = vmatpush1.msra.mxu0 %v274
    %451 = vmatprep.mubr.f32.mxu0 %v83
    %452 = vmatmul.mubr.f32.gmra.mrb[0].mxu0 %v82
    %v453 = vpop.f32.mrb[0].mxu0
    %v454 = vadd.f32 %v291, %v453
    %v455 = vpop.f32.mrb[0].mxu0
    %v456 = vadd.f32 %v295, %v455
    %457 = vmatprep.mubr.f32.mxu0 %v85
    %458 = vmatmul.mubr.f32.gmra.mrb[0].mxu0 %v84
    %v459 = vpop.f32.mrb[0].mxu0
    %v460 = vadd.f32 %v291, %v459
    %v461 = vpop.f32.mrb[0].mxu0
    %v462 = vadd.f32 %v295, %v461
    %463 = vdwg.mxu0
    %464 = vmatprep.subr.mxu0 %v91
    %465 = vmatpush1.msra.mxu0 %v90
    %466 = vmatprep.subr.mxu0 %v97
    %467 = vmatpush1.msra.mxu0 %v96
    %468 = vmatprep.subr.mxu0 %v103
    %469 = vmatpush1.msra.mxu0 %v102
    %470 = vmatprep.subr.mxu0 %v109
    %471 = vmatpush1.msra.mxu0 %v108
    %472 = vmatprep.subr.mxu0 %v115
    %473 = vmatpush1.msra.mxu0 %v114
    %474 = vmatprep.subr.mxu0 %v121
    %475 = vmatpush1.msra.mxu0 %v120
    %476 = vmatprep.subr.mxu0 %v127
    %477 = vmatpush1.msra.mxu0 %v126
    %478 = vmatprep.subr.mxu0 %v133
    %479 = vmatpush1.msra.mxu0 %v132
    %480 = vmatprep.subr.mxu0 %v139
    %481 = vmatpush1.msra.mxu0 %v138
    %482 = vmatprep.subr.mxu0 %v145
    %483 = vmatpush1.msra.mxu0 %v144
    %484 = vmatprep.subr.mxu0 %v151
    %485 = vmatpush1.msra.mxu0 %v150
    %486 = vmatprep.subr.mxu0 %v157
    %487 = vmatpush1.msra.mxu0 %v156
    %488 = vmatprep.subr.mxu0 %v163
    %489 = vmatpush1.msra.mxu0 %v162
    %490 = vmatprep.subr.mxu0 %v169
    %491 = vmatpush1.msra.mxu0 %v168
    %492 = vmatprep.subr.mxu0 %v175
    %493 = vmatpush1.msra.mxu0 %v174
    %494 = vmatprep.subr.mxu0 %v181
    %495 = vmatpush1.msra.mxu0 %v180
    %496 = vmatprep.subr.mxu0 %v187
    %497 = vmatpush1.msra.mxu0 %v186
    %498 = vmatprep.subr.mxu0 %v193
    %499 = vmatpush1.msra.mxu0 %v192
    %500 = vmatprep.subr.mxu0 %v199
    %501 = vmatpush1.msra.mxu0 %v198
    %502 = vmatprep.subr.mxu0 %v205
    %503 = vmatpush1.msra.mxu0 %v204
    %504 = vmatprep.subr.mxu0 %v211
    %505 = vmatpush1.msra.mxu0 %v210
    %506 = vmatprep.subr.mxu0 %v217
    %507 = vmatpush1.msra.mxu0 %v216
    %508 = vmatprep.subr.mxu0 %v223
    %509 = vmatpush1.msra.mxu0 %v222
    %510 = vmatprep.subr.mxu0 %v229
    %511 = vmatpush1.msra.mxu0 %v228
    %512 = vmatprep.subr.mxu0 %v235
    %513 = vmatpush1.msra.mxu0 %v234
    %514 = vmatprep.subr.mxu0 %v241
    %515 = vmatpush1.msra.mxu0 %v240
    %516 = vmatprep.subr.mxu0 %v247
    %517 = vmatpush1.msra.mxu0 %v246
    %518 = vmatprep.subr.mxu0 %v253
    %519 = vmatpush1.msra.mxu0 %v252
    %520 = vmatprep.subr.mxu0 %v259
    %521 = vmatpush1.msra.mxu0 %v258
    %522 = vmatprep.subr.mxu0 %v265
    %523 = vmatpush1.msra.mxu0 %v264
    %524 = vmatprep.subr.mxu0 %v271
    %525 = vmatpush1.msra.mxu0 %v270
    %526 = vmatprep.subr.mxu0 %v277
    %527 = vmatpush1.msra.mxu0 %v276
    %528 = vmatprep.mubr.f32.mxu0 %v83
    %529 = vmatmul.mubr.f32.gmra.mrb[0].mxu0 %v82
    %v530 = vpop.f32.mrb[0].mxu0
    %v531 = vadd.f32 %v299, %v530
    %v532 = vpop.f32.mrb[0].mxu0
    %v533 = vadd.f32 %v303, %v532
    %534 = vmatprep.mubr.f32.mxu0 %v85
    %535 = vmatmul.mubr.f32.gmra.mrb[0].mxu0 %v84
    %v536 = vpop.f32.mrb[0].mxu0
    %v537 = vadd.f32 %v299, %v536
    %v538 = vpop.f32.mrb[0].mxu0
    %v539 = vadd.f32 %v303, %v538
    %540 = vdwg.mxu0
    %541 = vmatprep.subr.mxu0 %v456
    %542 = vmatpush1.xpose.msra.mxu0 %v454
    %543 = vmatprep.subr.mxu0 0.0
    %544 = vmatpush1.xpose.msra.mxu0 0.0
    %545 = vmatprep.subr.mxu0 0.0
    %546 = vmatpush1.xpose.msra.mxu0 0.0
    %547 = vmatprep.subr.mxu0 0.0
    %548 = vmatpush1.xpose.msra.mxu0 0.0
    %549 = vmatprep.subr.mxu0 0.0
    %550 = vmatpush1.xpose.msra.mxu0 0.0
    %551 = vmatprep.subr.mxu0 0.0
    %552 = vmatpush1.xpose.msra.mxu0 0.0
    %553 = vmatprep.subr.mxu0 0.0
    %554 = vmatpush1.xpose.msra.mxu0 0.0
    %555 = vmatprep.subr.mxu0 0.0
    %556 = vmatpush1.xpose.msra.mxu0 0.0
    %557 = vmatprep.subr.mxu0 0.0
    %558 = vmatpush1.xpose.msra.mxu0 0.0
    %559 = vmatprep.subr.mxu0 0.0
    %560 = vmatpush1.xpose.msra.mxu0 0.0
    %561 = vmatprep.subr.mxu0 0.0
    %562 = vmatpush1.xpose.msra.mxu0 0.0
    %563 = vmatprep.subr.mxu0 0.0
    %564 = vmatpush1.xpose.msra.mxu0 0.0
    %565 = vmatprep.subr.mxu0 0.0
    %566 = vmatpush1.xpose.msra.mxu0 0.0
    %567 = vmatprep.subr.mxu0 0.0
    %568 = vmatpush1.xpose.msra.mxu0 0.0
    %569 = vmatprep.subr.mxu0 0.0
    %570 = vmatpush1.xpose.msra.mxu0 0.0
    %571 = vmatprep.subr.mxu0 0.0
    %572 = vmatpush1.xpose.msra.mxu0 0.0
    %573 = vmatprep.subr.mxu0 0.0
    %574 = vmatpush1.xpose.msra.mxu0 0.0
    %575 = vmatprep.subr.mxu0 0.0
    %576 = vmatpush1.xpose.msra.mxu0 0.0
    %577 = vmatprep.subr.mxu0 0.0
    %578 = vmatpush1.xpose.msra.mxu0 0.0
    %579 = vmatprep.subr.mxu0 0.0
    %580 = vmatpush1.xpose.msra.mxu0 0.0
    %581 = vmatprep.subr.mxu0 0.0
    %582 = vmatpush1.xpose.msra.mxu0 0.0
    %583 = vmatprep.subr.mxu0 0.0
    %584 = vmatpush1.xpose.msra.mxu0 0.0
    %585 = vmatprep.subr.mxu0 0.0
    %586 = vmatpush1.xpose.msra.mxu0 0.0
    %587 = vmatprep.subr.mxu0 0.0
    %588 = vmatpush1.xpose.msra.mxu0 0.0
    %589 = vmatprep.subr.mxu0 0.0
    %590 = vmatpush1.xpose.msra.mxu0 0.0
    %591 = vmatprep.subr.mxu0 0.0
    %592 = vmatpush1.xpose.msra.mxu0 0.0
    %593 = vmatprep.subr.mxu0 0.0
    %594 = vmatpush1.xpose.msra.mxu0 0.0
    %595 = vmatprep.subr.mxu0 0.0
    %596 = vmatpush1.xpose.msra.mxu0 0.0
    %597 = vmatprep.subr.mxu0 0.0
    %598 = vmatpush1.xpose.msra.mxu0 0.0
    %599 = vmatprep.subr.mxu0 0.0
    %600 = vmatpush1.xpose.msra.mxu0 0.0
    %601 = vmatprep.subr.mxu0 0.0
    %602 = vmatpush1.xpose.msra.mxu0 0.0
    %603 = vmatprep.subr.mxu0 0.0
    %604 = vmatpush1.xpose.msra.mxu0 0.0
    %605 = vmatprep.mubr.f32.mxu0 %v379
    %606 = vmatmul.mubr.f32.gmra.mrb[0].mxu0 %v377
    %v607 = vpop.f32.mrb[0].mxu0
    %v608 = vadd.f32 0.0, %v607
    %v609 = vpop.f32.mrb[0].mxu0
    %610 = vdwg.mxu0
    %611 = vmatprep.subr.mxu0 %v462
    %612 = vmatpush1.xpose.msra.mxu0 %v460
    %613 = vmatprep.subr.mxu0 0.0
    %614 = vmatpush1.xpose.msra.mxu0 0.0
    %615 = vmatprep.subr.mxu0 0.0
    %616 = vmatpush1.xpose.msra.mxu0 0.0
    %617 = vmatprep.subr.mxu0 0.0
    %618 = vmatpush1.xpose.msra.mxu0 0.0
    %619 = vmatprep.subr.mxu0 0.0
    %620 = vmatpush1.xpose.msra.mxu0 0.0
    %621 = vmatprep.subr.mxu0 0.0
    %622 = vmatpush1.xpose.msra.mxu0 0.0
    %623 = vmatprep.subr.mxu0 0.0
    %624 = vmatpush1.xpose.msra.mxu0 0.0
    %625 = vmatprep.subr.mxu0 0.0
    %626 = vmatpush1.xpose.msra.mxu0 0.0
    %627 = vmatprep.subr.mxu0 0.0
    %628 = vmatpush1.xpose.msra.mxu0 0.0
    %629 = vmatprep.subr.mxu0 0.0
    %630 = vmatpush1.xpose.msra.mxu0 0.0
    %631 = vmatprep.subr.mxu0 0.0
    %632 = vmatpush1.xpose.msra.mxu0 0.0
    %633 = vmatprep.subr.mxu0 0.0
    %634 = vmatpush1.xpose.msra.mxu0 0.0
    %635 = vmatprep.subr.mxu0 0.0
    %636 = vmatpush1.xpose.msra.mxu0 0.0
    %637 = vmatprep.subr.mxu0 0.0
    %638 = vmatpush1.xpose.msra.mxu0 0.0
    %639 = vmatprep.subr.mxu0 0.0
    %640 = vmatpush1.xpose.msra.mxu0 0.0
    %641 = vmatprep.subr.mxu0 0.0
    %642 = vmatpush1.xpose.msra.mxu0 0.0
    %643 = vmatprep.subr.mxu0 0.0
    %644 = vmatpush1.xpose.msra.mxu0 0.0
    %645 = vmatprep.subr.mxu0 0.0
    %646 = vmatpush1.xpose.msra.mxu0 0.0
    %647 = vmatprep.subr.mxu0 0.0
    %648 = vmatpush1.xpose.msra.mxu0 0.0
    %649 = vmatprep.subr.mxu0 0.0
    %650 = vmatpush1.xpose.msra.mxu0 0.0
    %651 = vmatprep.subr.mxu0 0.0
    %652 = vmatpush1.xpose.msra.mxu0 0.0
    %653 = vmatprep.subr.mxu0 0.0
    %654 = vmatpush1.xpose.msra.mxu0 0.0
    %655 = vmatprep.subr.mxu0 0.0
    %656 = vmatpush1.xpose.msra.mxu0 0.0
    %657 = vmatprep.subr.mxu0 0.0
    %658 = vmatpush1.xpose.msra.mxu0 0.0
    %659 = vmatprep.subr.mxu0 0.0
    %660 = vmatpush1.xpose.msra.mxu0 0.0
    %661 = vmatprep.subr.mxu0 0.0
    %662 = vmatpush1.xpose.msra.mxu0 0.0
    %663 = vmatprep.subr.mxu0 0.0
    %664 = vmatpush1.xpose.msra.mxu0 0.0
    %665 = vmatprep.subr.mxu0 0.0
    %666 = vmatpush1.xpose.msra.mxu0 0.0
    %667 = vmatprep.subr.mxu0 0.0
    %668 = vmatpush1.xpose.msra.mxu0 0.0
    %669 = vmatprep.subr.mxu0 0.0
    %670 = vmatpush1.xpose.msra.mxu0 0.0
    %671 = vmatprep.subr.mxu0 0.0
    %672 = vmatpush1.xpose.msra.mxu0 0.0
    %673 = vmatprep.subr.mxu0 0.0
    %674 = vmatpush1.xpose.msra.mxu0 0.0
    %675 = vmatprep.mubr.f32.mxu0 %v385
    %676 = vmatmul.mubr.f32.gmra.mrb[0].mxu0 %v383
    %v677 = vpop.f32.mrb[0].mxu0
    %v678 = vadd.f32 0.0, %v677
    %v679 = vpop.f32.mrb[0].mxu0
    %680 = vdwg.mxu0
    %v681 = vmul.f32 %v608, 0.0625
    %v682 = vmul.f32 %v678, 0.0625
    %vm683 = vcmask 64512
    %v684 = vsel %vm683, %v681, -inf
    %685 = vmax.xlane.f32.xlu0 %v684
    %v686 = vpop.xlane.xlu0 %685
    %v687 = vsel %vm683, %v682, -inf
    %688 = vmax.xlane.f32.xlu0 %v687
    %v689 = vpop.xlane.xlu0 %688
    %v690 = vsub.f32 %v681, %v686
    %v691 = vsub.f32 %v682, %v689
    %v692 = vmul.f32 %v690, 1.442695
    %v693 = vpow.pop %v692
    %v694 = vmul.f32 %v691, 1.442695
    %v695 = vpow.pop %v694
    %v696 = vsel %vm683, %v693, 0.0
    %697 = vadd.xlane.f32.xlu0 %v696
    %v698 = vpop.xlane.xlu0 %697
    %v699 = vsel %vm683, %v695, 0.0
    %700 = vadd.xlane.f32.xlu0 %v699
    %v701 = vpop.xlane.xlu0 %700
    %v703 = vsel %vm683, %v693, 0
    %705 = vmatprep.subr.mxu0 %v533
    %706 = vmatpush1.msra.mxu0 %v531
    %707 = vmatprep.subr.mxu0 0.0
    %708 = vmatpush1.msra.mxu0 0.0
    %709 = vmatprep.subr.mxu0 0.0
    %710 = vmatpush1.msra.mxu0 0.0
    %711 = vmatprep.subr.mxu0 0.0
    %712 = vmatpush1.msra.mxu0 0.0
    %713 = vmatprep.subr.mxu0 0.0
    %714 = vmatpush1.msra.mxu0 0.0
    %715 = vmatprep.subr.mxu0 0.0
    %716 = vmatpush1.msra.mxu0 0.0
    %717 = vmatprep.subr.mxu0 0.0
    %718 = vmatpush1.msra.mxu0 0.0
    %719 = vmatprep.subr.mxu0 0.0
    %720 = vmatpush1.msra.mxu0 0.0
    %721 = vmatprep.subr.mxu0 0.0
    %722 = vmatpush1.msra.mxu0 0.0
    %723 = vmatprep.subr.mxu0 0.0
    %724 = vmatpush1.msra.mxu0 0.0
    %725 = vmatprep.subr.mxu0 0.0
    %726 = vmatpush1.msra.mxu0 0.0
    %727 = vmatprep.subr.mxu0 0.0
    %728 = vmatpush1.msra.mxu0 0.0
    %729 = vmatprep.subr.mxu0 0.0
    %730 = vmatpush1.msra.mxu0 0.0
    %731 = vmatprep.subr.mxu0 0.0
    %732 = vmatpush1.msra.mxu0 0.0
    %733 = vmatprep.subr.mxu0 0.0
    %734 = vmatpush1.msra.mxu0 0.0
    %735 = vmatprep.subr.mxu0 0.0
    %736 = vmatpush1.msra.mxu0 0.0
    %737 = vmatprep.subr.mxu0 0.0
    %738 = vmatpush1.msra.mxu0 0.0
    %739 = vmatprep.subr.mxu0 0.0
    %740 = vmatpush1.msra.mxu0 0.0
    %741 = vmatprep.subr.mxu0 0.0
    %742 = vmatpush1.msra.mxu0 0.0
    %743 = vmatprep.subr.mxu0 0.0
    %744 = vmatpush1.msra.mxu0 0.0
    %745 = vmatprep.subr.mxu0 0.0
    %746 = vmatpush1.msra.mxu0 0.0
    %747 = vmatprep.subr.mxu0 0.0
    %748 = vmatpush1.msra.mxu0 0.0
    %749 = vmatprep.subr.mxu0 0.0
    %750 = vmatpush1.msra.mxu0 0.0
    %751 = vmatprep.subr.mxu0 0.0
    %752 = vmatpush1.msra.mxu0 0.0
    %753 = vmatprep.subr.mxu0 0.0
    %754 = vmatpush1.msra.mxu0 0.0
    %755 = vmatprep.subr.mxu0 0.0
    %756 = vmatpush1.msra.mxu0 0.0
    %757 = vmatprep.subr.mxu0 0.0
    %758 = vmatpush1.msra.mxu0 0.0
    %759 = vmatprep.subr.mxu0 0.0
    %760 = vmatpush1.msra.mxu0 0.0
    %761 = vmatprep.subr.mxu0 0.0
    %762 = vmatpush1.msra.mxu0 0.0
    %763 = vmatprep.subr.mxu0 0.0
    %764 = vmatpush1.msra.mxu0 0.0
    %765 = vmatprep.subr.mxu0 0.0
    %766 = vmatpush1.msra.mxu0 0.0
    %767 = vmatprep.subr.mxu0 0.0
    %768 = vmatpush1.msra.mxu0 0.0
    %769 = vmatprep.mubr.f32.mxu0 0.0
    %770 = vmatmul.mubr.f32.gmra.mrb[0].mxu0 %v703
    %v771 = vpop.f32.mrb[0].mxu0
    %v772 = vadd.f32 0.0, %v771
    %v773 = vpop.f32.mrb[0].mxu0
    %v774 = vadd.f32 0.0, %v773
    %775 = vdwg.mxu0
    %v777 = vsel %vm683, %v695, 0
    %779 = vmatprep.subr.mxu0 %v539
    %780 = vmatpush1.msra.mxu0 %v537
    %781 = vmatprep.subr.mxu0 0.0
    %782 = vmatpush1.msra.mxu0 0.0
    %783 = vmatprep.subr.mxu0 0.0
    %784 = vmatpush1.msra.mxu0 0.0
    %785 = vmatprep.subr.mxu0 0.0
    %786 = vmatpush1.msra.mxu0 0.0
    %787 = vmatprep.subr.mxu0 0.0
    %788 = vmatpush1.msra.mxu0 0.0
    %789 = vmatprep.subr.mxu0 0.0
    %790 = vmatpush1.msra.mxu0 0.0
    %791 = vmatprep.subr.mxu0 0.0
    %792 = vmatpush1.msra.mxu0 0.0
    %793 = vmatprep.subr.mxu0 0.0
    %794 = vmatpush1.msra.mxu0 0.0
    %795 = vmatprep.subr.mxu0 0.0
    %796 = vmatpush1.msra.mxu0 0.0
    %797 = vmatprep.subr.mxu0 0.0
    %798 = vmatpush1.msra.mxu0 0.0
    %799 = vmatprep.subr.mxu0 0.0
    %800 = vmatpush1.msra.mxu0 0.0
    %801 = vmatprep.subr.mxu0 0.0
    %802 = vmatpush1.msra.mxu0 0.0
    %803 = vmatprep.subr.mxu0 0.0
    %804 = vmatpush1.msra.mxu0 0.0
    %805 = vmatprep.subr.mxu0 0.0
    %806 = vmatpush1.msra.mxu0 0.0
    %807 = vmatprep.subr.mxu0 0.0
    %808 = vmatpush1.msra.mxu0 0.0
    %809 = vmatprep.subr.mxu0 0.0
    %810 = vmatpush1.msra.mxu0 0.0
    %811 = vmatprep.subr.mxu0 0.0
    %812 = vmatpush1.msra.mxu0 0.0
    %813 = vmatprep.subr.mxu0 0.0
    %814 = vmatpush1.msra.mxu0 0.0
    %815 = vmatprep.subr.mxu0 0.0
    %816 = vmatpush1.msra.mxu0 0.0
    %817 = vmatprep.subr.mxu0 0.0
    %818 = vmatpush1.msra.mxu0 0.0
    %819 = vmatprep.subr.mxu0 0.0
    %820 = vmatpush1.msra.mxu0 0.0
    %821 = vmatprep.subr.mxu0 0.0
    %822 = vmatpush1.msra.mxu0 0.0
    %823 = vmatprep.subr.mxu0 0.0
    %824 = vmatpush1.msra.mxu0 0.0
    %825 = vmatprep.subr.mxu0 0.0
    %826 = vmatpush1.msra.mxu0 0.0
    %827 = vmatprep.subr.mxu0 0.0
    %828 = vmatpush1.msra.mxu0 0.0
    %829 = vmatprep.subr.mxu0 0.0
    %830 = vmatpush1.msra.mxu0 0.0
    %831 = vmatprep.subr.mxu0 0.0
    %832 = vmatpush1.msra.mxu0 0.0
    %833 = vmatprep.subr.mxu0 0.0
    %834 = vmatpush1.msra.mxu0 0.0
    %835 = vmatprep.subr.mxu0 0.0
    %836 = vmatpush1.msra.mxu0 0.0
    %837 = vmatprep.subr.mxu0 0.0
    %838 = vmatpush1.msra.mxu0 0.0
    %839 = vmatprep.subr.mxu0 0.0
    %840 = vmatpush1.msra.mxu0 0.0
    %841 = vmatprep.subr.mxu0 0.0
    %842 = vmatpush1.msra.mxu0 0.0
    %843 = vmatprep.mubr.f32.mxu0 0.0
    %844 = vmatmul.mubr.f32.gmra.mrb[0].mxu0 %v777
    %v845 = vpop.f32.mrb[0].mxu0
    %v846 = vadd.f32 0.0, %v845
    %v847 = vpop.f32.mrb[0].mxu0
    %v848 = vadd.f32 0.0, %v847
    %849 = vdwg.mxu0
    %v850 = vrcp.pop %v698
    %v851 = vrcp.pop %v701
    %v852 = vmul.f32 %v772, %v850
    %v853 = vmul.f32 %v774, %v850
    %v854 = vmul.f32 %v846, %v851
    %v855 = vmul.f32 %v848, %v851
    %v856 = vadd.f32 %v82, %v852
    %v857 = vadd.f32 %v83, %v853
    %v858 = vadd.f32 %v84, %v854
    %v859 = vadd.f32 %v85, %v855
    %v860 = vld [vmem:[#allocation7] sm:$0xff]
    %v861 = vld [vmem:[#allocation7 + $0x8] sm:$0xff]
    %v862 = vld [vmem:[#allocation7 + $0x10] sm:$0xff]
    %v863 = vld [vmem:[#allocation7 + $0x18] sm:$0xff]
    %v864 = vld [vmem:[#allocation7 + $0x20] sm:$0xff]
    %v865 = vld [vmem:[#allocation7 + $0x28] sm:$0xff]
    %v866 = vld [vmem:[#allocation7 + $0x30] sm:$0xff]
    %v867 = vld [vmem:[#allocation7 + $0x38] sm:$0xff]
    %v868 = vld [vmem:[#allocation7 + $0x40] sm:$0xff]
    %v869 = vld [vmem:[#allocation7 + $0x48] sm:$0xff]
    %v870 = vld [vmem:[#allocation7 + $0x50] sm:$0xff]
    %v871 = vld [vmem:[#allocation7 + $0x58] sm:$0xff]
    %v872 = vld [vmem:[#allocation7 + $0x60] sm:$0xff]
    %v873 = vld [vmem:[#allocation7 + $0x68] sm:$0xff]
    %v874 = vld [vmem:[#allocation7 + $0x70] sm:$0xff]
    %v875 = vld [vmem:[#allocation7 + $0x78] sm:$0xff]
    %v876 = vld [vmem:[#allocation7 + $0x80] sm:$0xff]
    %v877 = vld [vmem:[#allocation7 + $0x88] sm:$0xff]
    %v878 = vld [vmem:[#allocation7 + $0x90] sm:$0xff]
    %v879 = vld [vmem:[#allocation7 + $0x98] sm:$0xff]
    %v880 = vld [vmem:[#allocation7 + $0xa0] sm:$0xff]
    %v881 = vld [vmem:[#allocation7 + $0xa8] sm:$0xff]
    %v882 = vld [vmem:[#allocation7 + $0xb0] sm:$0xff]
    %v883 = vld [vmem:[#allocation7 + $0xb8] sm:$0xff]
    %v884 = vld [vmem:[#allocation7 + $0xc0] sm:$0xff]
    %v885 = vld [vmem:[#allocation7 + $0xc8] sm:$0xff]
    %v886 = vld [vmem:[#allocation7 + $0xd0] sm:$0xff]
    %v887 = vld [vmem:[#allocation7 + $0xd8] sm:$0xff]
    %v888 = vld [vmem:[#allocation7 + $0xe0] sm:$0xff]
    %v889 = vld [vmem:[#allocation7 + $0xe8] sm:$0xff]
    %v890 = vld [vmem:[#allocation7 + $0xf0] sm:$0xff]
    %v891 = vld [vmem:[#allocation7 + $0xf8] sm:$0xff]
    %v892 = vld [vmem:[#allocation7 + $0x100] sm:$0xff]
    %v893 = vld [vmem:[#allocation7 + $0x108] sm:$0xff]
    %v894 = vld [vmem:[#allocation7 + $0x110] sm:$0xff]
    %v895 = vld [vmem:[#allocation7 + $0x118] sm:$0xff]
    %v896 = vld [vmem:[#allocation7 + $0x120] sm:$0xff]
    %v897 = vld [vmem:[#allocation7 + $0x128] sm:$0xff]
    %v898 = vld [vmem:[#allocation7 + $0x130] sm:$0xff]
    %v899 = vld [vmem:[#allocation7 + $0x138] sm:$0xff]
    %v900 = vld [vmem:[#allocation7 + $0x140] sm:$0xff]
    %v901 = vld [vmem:[#allocation7 + $0x148] sm:$0xff]
    %v902 = vld [vmem:[#allocation7 + $0x150] sm:$0xff]
    %v903 = vld [vmem:[#allocation7 + $0x158] sm:$0xff]
    %v904 = vld [vmem:[#allocation7 + $0x160] sm:$0xff]
    %v905 = vld [vmem:[#allocation7 + $0x168] sm:$0xff]
    %v906 = vld [vmem:[#allocation7 + $0x170] sm:$0xff]
    %v907 = vld [vmem:[#allocation7 + $0x178] sm:$0xff]
    %v908 = vld [vmem:[#allocation7 + $0x180] sm:$0xff]
    %v909 = vld [vmem:[#allocation7 + $0x188] sm:$0xff]
    %v910 = vld [vmem:[#allocation7 + $0x190] sm:$0xff]
    %v911 = vld [vmem:[#allocation7 + $0x198] sm:$0xff]
    %v912 = vld [vmem:[#allocation7 + $0x1a0] sm:$0xff]
    %v913 = vld [vmem:[#allocation7 + $0x1a8] sm:$0xff]
    %v914 = vld [vmem:[#allocation7 + $0x1b0] sm:$0xff]
    %v915 = vld [vmem:[#allocation7 + $0x1b8] sm:$0xff]
    %v916 = vld [vmem:[#allocation7 + $0x1c0] sm:$0xff]
    %v917 = vld [vmem:[#allocation7 + $0x1c8] sm:$0xff]
    %v918 = vld [vmem:[#allocation7 + $0x1d0] sm:$0xff]
    %v919 = vld [vmem:[#allocation7 + $0x1d8] sm:$0xff]
    %v920 = vld [vmem:[#allocation7 + $0x1e0] sm:$0xff]
    %v921 = vld [vmem:[#allocation7 + $0x1e8] sm:$0xff]
    %v922 = vld [vmem:[#allocation7 + $0x1f0] sm:$0xff]
    %v923 = vld [vmem:[#allocation7 + $0x1f8] sm:$0xff]
    %v924 = vld [vmem:[%s4] sm:$0x3]
    %v926 = vlaneseq
    %v927 = vshrl.u32 %v926, 7
    %v928 = vsub.s32 0, %v927
    %v929 = vrot.slane %v924, %v928
    %v930 = vlaneseq
    %v931 = vshrl.u32 %v930, 7
    %v932 = vsub.s32 1, %v931
    %v933 = vrot.slane %v924, %v932
    %936 = vmatprep.subr.mxu0 %v861
    %937 = vmatpush1.msra.mxu0 %v860
    %938 = vmatprep.subr.mxu0 %v863
    %939 = vmatpush1.msra.mxu0 %v862
    %940 = vmatprep.subr.mxu0 %v865
    %941 = vmatpush1.msra.mxu0 %v864
    %942 = vmatprep.subr.mxu0 %v867
    %943 = vmatpush1.msra.mxu0 %v866
    %944 = vmatprep.subr.mxu0 %v869
    %945 = vmatpush1.msra.mxu0 %v868
    %946 = vmatprep.subr.mxu0 %v871
    %947 = vmatpush1.msra.mxu0 %v870
    %948 = vmatprep.subr.mxu0 %v873
    %949 = vmatpush1.msra.mxu0 %v872
    %950 = vmatprep.subr.mxu0 %v875
    %951 = vmatpush1.msra.mxu0 %v874
    %952 = vmatprep.subr.mxu0 %v877
    %953 = vmatpush1.msra.mxu0 %v876
    %954 = vmatprep.subr.mxu0 %v879
    %955 = vmatpush1.msra.mxu0 %v878
    %956 = vmatprep.subr.mxu0 %v881
    %957 = vmatpush1.msra.mxu0 %v880
    %958 = vmatprep.subr.mxu0 %v883
    %959 = vmatpush1.msra.mxu0 %v882
    %960 = vmatprep.subr.mxu0 %v885
    %961 = vmatpush1.msra.mxu0 %v884
    %962 = vmatprep.subr.mxu0 %v887
    %963 = vmatpush1.msra.mxu0 %v886
    %964 = vmatprep.subr.mxu0 %v889
    %965 = vmatpush1.msra.mxu0 %v888
    %966 = vmatprep.subr.mxu0 %v891
    %967 = vmatpush1.msra.mxu0 %v890
    %968 = vmatprep.subr.mxu0 %v893
    %969 = vmatpush1.msra.mxu0 %v892
    %970 = vmatprep.subr.mxu0 %v895
    %971 = vmatpush1.msra.mxu0 %v894
    %972 = vmatprep.subr.mxu0 %v897
    %973 = vmatpush1.msra.mxu0 %v896
    %974 = vmatprep.subr.mxu0 %v899
    %975 = vmatpush1.msra.mxu0 %v898
    %976 = vmatprep.subr.mxu0 %v901
    %977 = vmatpush1.msra.mxu0 %v900
    %978 = vmatprep.subr.mxu0 %v903
    %979 = vmatpush1.msra.mxu0 %v902
    %980 = vmatprep.subr.mxu0 %v905
    %981 = vmatpush1.msra.mxu0 %v904
    %982 = vmatprep.subr.mxu0 %v907
    %983 = vmatpush1.msra.mxu0 %v906
    %984 = vmatprep.subr.mxu0 %v909
    %985 = vmatpush1.msra.mxu0 %v908
    %986 = vmatprep.subr.mxu0 %v911
    %987 = vmatpush1.msra.mxu0 %v910
    %988 = vmatprep.subr.mxu0 %v913
    %989 = vmatpush1.msra.mxu0 %v912
    %990 = vmatprep.subr.mxu0 %v915
    %991 = vmatpush1.msra.mxu0 %v914
    %992 = vmatprep.subr.mxu0 %v917
    %993 = vmatpush1.msra.mxu0 %v916
    %994 = vmatprep.subr.mxu0 %v919
    %995 = vmatpush1.msra.mxu0 %v918
    %996 = vmatprep.subr.mxu0 %v921
    %997 = vmatpush1.msra.mxu0 %v920
    %998 = vmatprep.subr.mxu0 %v923
    %999 = vmatpush1.msra.mxu0 %v922
    %1000 = vmatprep.mubr.f32.mxu0 %v857
    %1001 = vmatmul.mubr.f32.gmra.mrb[0].mxu0 %v856
    %v1002 = vpop.f32.mrb[0].mxu0
    %v1003 = vadd.f32 %v929, %v1002
    %v1004 = vpop.f32.mrb[0].mxu0
    %v1005 = vadd.f32 %v933, %v1004
    %1006 = vmatprep.mubr.f32.mxu0 %v859
    %1007 = vmatmul.mubr.f32.gmra.mrb[0].mxu0 %v858
    %v1008 = vpop.f32.mrb[0].mxu0
    %v1009 = vadd.f32 %v929, %v1008
    %v1010 = vpop.f32.mrb[0].mxu0
    %v1011 = vadd.f32 %v933, %v1010
    %1012 = vdwg.mxu0
    %v1013 = vmax.f32 %v1003, 0.0
    %v1014 = vmax.f32 %v1005, 0.0
    %v1015 = vmax.f32 %v1009, 0.0
    %v1016 = vmax.f32 %v1011, 0.0
    %v1017 = vld [vmem:[#allocation8] sm:$0xff]
    %v1018 = vld [vmem:[#allocation8 + $0x8] sm:$0xff]
    %v1019 = vld [vmem:[#allocation8 + $0x10] sm:$0xff]
    %v1020 = vld [vmem:[#allocation8 + $0x18] sm:$0xff]
    %v1021 = vld [vmem:[#allocation8 + $0x20] sm:$0xff]
    %v1022 = vld [vmem:[#allocation8 + $0x28] sm:$0xff]
    %v1023 = vld [vmem:[#allocation8 + $0x30] sm:$0xff]
    %v1024 = vld [vmem:[#allocation8 + $0x38] sm:$0xff]
    %v1025 = vld [vmem:[#allocation8 + $0x40] sm:$0xff]
    %v1026 = vld [vmem:[#allocation8 + $0x48] sm:$0xff]
    %v1027 = vld [vmem:[#allocation8 + $0x50] sm:$0xff]
    %v1028 = vld [vmem:[#allocation8 + $0x58] sm:$0xff]
    %v1029 = vld [vmem:[#allocation8 + $0x60] sm:$0xff]
    %v1030 = vld [vmem:[#allocation8 + $0x68] sm:$0xff]
    %v1031 = vld [vmem:[#allocation8 + $0x70] sm:$0xff]
    %v1032 = vld [vmem:[#allocation8 + $0x78] sm:$0xff]
    %v1033 = vld [vmem:[#allocation8 + $0x80] sm:$0xff]
    %v1034 = vld [vmem:[#allocation8 + $0x88] sm:$0xff]
    %v1035 = vld [vmem:[#allocation8 + $0x90] sm:$0xff]
    %v1036 = vld [vmem:[#allocation8 + $0x98] sm:$0xff]
    %v1037 = vld [vmem:[#allocation8 + $0xa0] sm:$0xff]
    %v1038 = vld [vmem:[#allocation8 + $0xa8] sm:$0xff]
    %v1039 = vld [vmem:[#allocation8 + $0xb0] sm:$0xff]
    %v1040 = vld [vmem:[#allocation8 + $0xb8] sm:$0xff]
    %v1041 = vld [vmem:[#allocation8 + $0xc0] sm:$0xff]
    %v1042 = vld [vmem:[#allocation8 + $0xc8] sm:$0xff]
    %v1043 = vld [vmem:[#allocation8 + $0xd0] sm:$0xff]
    %v1044 = vld [vmem:[#allocation8 + $0xd8] sm:$0xff]
    %v1045 = vld [vmem:[#allocation8 + $0xe0] sm:$0xff]
    %v1046 = vld [vmem:[#allocation8 + $0xe8] sm:$0xff]
    %v1047 = vld [vmem:[#allocation8 + $0xf0] sm:$0xff]
    %v1048 = vld [vmem:[#allocation8 + $0xf8] sm:$0xff]
    %v1049 = vld [vmem:[#allocation8 + $0x100] sm:$0xff]
    %v1050 = vld [vmem:[#allocation8 + $0x108] sm:$0xff]
    %v1051 = vld [vmem:[#allocation8 + $0x110] sm:$0xff]
    %v1052 = vld [vmem:[#allocation8 + $0x118] sm:$0xff]
    %v1053 = vld [vmem:[#allocation8 + $0x120] sm:$0xff]
    %v1054 = vld [vmem:[#allocation8 + $0x128] sm:$0xff]
    %v1055 = vld [vmem:[#allocation8 + $0x130] sm:$0xff]
    %v1056 = vld [vmem:[#allocation8 + $0x138] sm:$0xff]
    %v1057 = vld [vmem:[#allocation8 + $0x140] sm:$0xff]
    %v1058 = vld [vmem:[#allocation8 + $0x148] sm:$0xff]
    %v1059 = vld [vmem:[#allocation8 + $0x150] sm:$0xff]
    %v1060 = vld [vmem:[#allocation8 + $0x158] sm:$0xff]
    %v1061 = vld [vmem:[#allocation8 + $0x160] sm:$0xff]
    %v1062 = vld [vmem:[#allocation8 + $0x168] sm:$0xff]
    %v1063 = vld [vmem:[#allocation8 + $0x170] sm:$0xff]
    %v1064 = vld [vmem:[#allocation8 + $0x178] sm:$0xff]
    %v1065 = vld [vmem:[#allocation8 + $0x180] sm:$0xff]
    %v1066 = vld [vmem:[#allocation8 + $0x188] sm:$0xff]
    %v1067 = vld [vmem:[#allocation8 + $0x190] sm:$0xff]
    %v1068 = vld [vmem:[#allocation8 + $0x198] sm:$0xff]
    %v1069 = vld [vmem:[#allocation8 + $0x1a0] sm:$0xff]
    %v1070 = vld [vmem:[#allocation8 + $0x1a8] sm:$0xff]
    %v1071 = vld [vmem:[#allocation8 + $0x1b0] sm:$0xff]
    %v1072 = vld [vmem:[#allocation8 + $0x1b8] sm:$0xff]
    %v1073 = vld [vmem:[#allocation8 + $0x1c0] sm:$0xff]
    %v1074 = vld [vmem:[#allocation8 + $0x1c8] sm:$0xff]
    %v1075 = vld [vmem:[#allocation8 + $0x1d0] sm:$0xff]
    %v1076 = vld [vmem:[#allocation8 + $0x1d8] sm:$0xff]
    %v1077 = vld [vmem:[#allocation8 + $0x1e0] sm:$0xff]
    %v1078 = vld [vmem:[#allocation8 + $0x1e8] sm:$0xff]
    %v1079 = vld [vmem:[#allocation8 + $0x1f0] sm:$0xff]
    %v1080 = vld [vmem:[#allocation8 + $0x1f8] sm:$0xff]
    %v1081 = vld [vmem:[%s6] sm:$0x3]
    %v1083 = vlaneseq
    %v1084 = vshrl.u32 %v1083, 7
    %v1085 = vsub.s32 0, %v1084
    %v1086 = vrot.slane %v1081, %v1085
    %v1087 = vlaneseq
    %v1088 = vshrl.u32 %v1087, 7
    %v1089 = vsub.s32 1, %v1088
    %v1090 = vrot.slane %v1081, %v1089
    %1093 = vmatprep.subr.mxu0 %v1018
    %1094 = vmatpush1.msra.mxu0 %v1017
    %1095 = vmatprep.subr.mxu0 %v1020
    %1096 = vmatpush1.msra.mxu0 %v1019
    %1097 = vmatprep.subr.mxu0 %v1022
    %1098 = vmatpush1.msra.mxu0 %v1021
    %1099 = vmatprep.subr.mxu0 %v1024
    %1100 = vmatpush1.msra.mxu0 %v1023
    %1101 = vmatprep.subr.mxu0 %v1026
    %1102 = vmatpush1.msra.mxu0 %v1025
    %1103 = vmatprep.subr.mxu0 %v1028
    %1104 = vmatpush1.msra.mxu0 %v1027
    %1105 = vmatprep.subr.mxu0 %v1030
    %1106 = vmatpush1.msra.mxu0 %v1029
    %1107 = vmatprep.subr.mxu0 %v1032
    %1108 = vmatpush1.msra.mxu0 %v1031
    %1109 = vmatprep.subr.mxu0 %v1034
    %1110 = vmatpush1.msra.mxu0 %v1033
    %1111 = vmatprep.subr.mxu0 %v1036
    %1112 = vmatpush1.msra.mxu0 %v1035
    %1113 = vmatprep.subr.mxu0 %v1038
    %1114 = vmatpush1.msra.mxu0 %v1037
    %1115 = vmatprep.subr.mxu0 %v1040
    %1116 = vmatpush1.msra.mxu0 %v1039
    %1117 = vmatprep.subr.mxu0 %v1042
    %1118 = vmatpush1.msra.mxu0 %v1041
    %1119 = vmatprep.subr.mxu0 %v1044
    %1120 = vmatpush1.msra.mxu0 %v1043
    %1121 = vmatprep.subr.mxu0 %v1046
    %1122 = vmatpush1.msra.mxu0 %v1045
    %1123 = vmatprep.subr.mxu0 %v1048
    %1124 = vmatpush1.msra.mxu0 %v1047
    %1125 = vmatprep.subr.mxu0 %v1050
    %1126 = vmatpush1.msra.mxu0 %v1049
    %1127 = vmatprep.subr.mxu0 %v1052
    %1128 = vmatpush1.msra.mxu0 %v1051
    %1129 = vmatprep.subr.mxu0 %v1054
    %1130 = vmatpush1.msra.mxu0 %v1053
    %1131 = vmatprep.subr.mxu0 %v1056
    %1132 = vmatpush1.msra.mxu0 %v1055
    %1133 = vmatprep.subr.mxu0 %v1058
    %1134 = vmatpush1.msra.mxu0 %v1057
    %1135 = vmatprep.subr.mxu0 %v1060
    %1136 = vmatpush1.msra.mxu0 %v1059
    %1137 = vmatprep.subr.mxu0 %v1062
    %1138 = vmatpush1.msra.mxu0 %v1061
    %1139 = vmatprep.subr.mxu0 %v1064
    %1140 = vmatpush1.msra.mxu0 %v1063
    %1141 = vmatprep.subr.mxu0 %v1066
    %1142 = vmatpush1.msra.mxu0 %v1065
    %1143 = vmatprep.subr.mxu0 %v1068
    %1144 = vmatpush1.msra.mxu0 %v1067
    %1145 = vmatprep.subr.mxu0 %v1070
    %1146 = vmatpush1.msra.mxu0 %v1069
    %1147 = vmatprep.subr.mxu0 %v1072
    %1148 = vmatpush1.msra.mxu0 %v1071
    %1149 = vmatprep.subr.mxu0 %v1074
    %1150 = vmatpush1.msra.mxu0 %v1073
    %1151 = vmatprep.subr.mxu0 %v1076
    %1152 = vmatpush1.msra.mxu0 %v1075
    %1153 = vmatprep.subr.mxu0 %v1078
    %1154 = vmatpush1.msra.mxu0 %v1077
    %1155 = vmatprep.subr.mxu0 %v1080
    %1156 = vmatpush1.msra.mxu0 %v1079
    %1157 = vmatprep.mubr.f32.mxu0 %v1014
    %1158 = vmatmul.mubr.f32.gmra.mrb[0].mxu0 %v1013
    %v1159 = vpop.f32.mrb[0].mxu0
    %v1160 = vadd.f32 %v1086, %v1159
    %v1161 = vpop.f32.mrb[0].mxu0
    %v1162 = vadd.f32 %v1090, %v1161
    %1163 = vmatprep.mubr.f32.mxu0 %v1016
    %1164 = vmatmul.mubr.f32.gmra.mrb[0].mxu0 %v1015
    %v1165 = vpop.f32.mrb[0].mxu0
    %v1166 = vadd.f32 %v1086, %v1165
    %v1167 = vpop.f32.mrb[0].mxu0
    %v1168 = vadd.f32 %v1090, %v1167
    %1169 = vdwg.mxu0
    %v1170 = vadd.f32 %v1160, %v1160
    %v1171 = vadd.f32 %v1162, %v1162
    %v1172 = vadd.f32 %v1166, %v1166
    %v1173 = vadd.f32 %v1168, %v1168
    %1174 = vst [vmem:[#allocation10] sm:$0xff] %v1170
    %1175 = vst [vmem:[#allocation10 + $0x8] sm:$0xff] %v1171
    %1176 = vst [vmem:[#allocation10 + $0x10] sm:$0xff] %v1172
    %1177 = vst [vmem:[#allocation10 + $0x18] sm:$0xff] %v1173
    // Predicated region
    $region46: #{transformer_encoder.1} parent=1 // pred_check
      _
    $region47: #{transformer_encoder.1} parent=1 // pred_check_branch
      %1179 = sbr.rel (0) target = $region49
    $region48: #{transformer_encoder.1} parent=1 // pred_region
      %s1181 = ssub.s32 512, 512
      %1182 = vsyncadd [#allocation4], %s1181
      %s1183 = sshll.u32 [#allocation10], 4
      %s1184 = int_to_ptr.vmem [resolvable:$true] %s1183
      %1189 = dma.vmem_to_hbm [thread:$0]  %s1184, 512, %s7, [#allocation4], 256, 256, 16
    $region49: #{transformer_encoder.1} parent=1 // pred_fallthru
      _
    // Predicated region
    $region50: #{transformer_encoder.1} parent=1 // pred_check
      _
    $region51: #{transformer_encoder.1} parent=1 // pred_check_branch
      %1191 = sbr.rel (0) target = $region53
    $region52: #{transformer_encoder.1} parent=1 // pred_region
      %1192 = dma.done [#allocation4], 512
    $region53: #{transformer_encoder.1} parent=1 // pred_fallthru
      _
    %1193 = vsyncpa [#allocation3], 1
    %1194 = vsyncpa [#allocation6], 1
    %1195 = vsyncpa [#allocation9], 1
    %1196 = vsyncpa [#allocation4], 1

</llo_original>
